<compile_context>
chip_gen: v5e
topology: v5e:2x2
jax: 0.10.0
libtpu: 0.0.40
codegen_flags: <defaults>
</compile_context>

<pallas_src>
import functools

import jax
import jax.numpy as jnp
from jax.experimental import pallas as pl
from jax.experimental.pallas import tpu as pltpu

_MASK_BIAS = -1e30  # finite "-inf": exp() underflows to exactly 0.


def _general_attn_kernel(*refs, has_mask, return_attn):
    if has_mask and return_attn:
        q_ref, k_ref, v_ref, w_ref, mask_ref, out_ref, attn_ref, kw_ref = refs
    elif has_mask:
        q_ref, k_ref, v_ref, w_ref, mask_ref, out_ref, kw_ref = refs
        attn_ref = None
    elif return_attn:
        q_ref, k_ref, v_ref, w_ref, out_ref, attn_ref, kw_ref = refs
        mask_ref = None
    else:
        q_ref, k_ref, v_ref, w_ref, out_ref, kw_ref = refs
        mask_ref = attn_ref = None

    # Hoisted once per batch element: kW = k @ W^T kept resident in VMEM
    # (k / W blocks do not change along the q-tile grid axis).
    @pl.when(pl.program_id(1) == 0)
    def _():
        k_bf = k_ref[0].astype(jnp.bfloat16)                   # (T_k, D_k)
        w_bf = w_ref[...].astype(jnp.bfloat16)                 # (D_q, D_k)
        kw = jax.lax.dot_general(                              # (T_k, D_q)
            k_bf, w_bf, (((1,), (1,)), ((), ())),
            preferred_element_type=jnp.float32)
        kw_ref[...] = kw.astype(kw_ref.dtype)

    # scores = q @ W @ k^T = q @ (k @ W^T)^T, contracting D_q (bf16 on MXU).
    q_bf = q_ref[0].astype(jnp.bfloat16)                       # (TQ, D_q)
    scores = jax.lax.dot_general(                              # (TQ, T_k)
        q_bf, kw_ref[...], (((1,), (1,)), ((), ())),
        preferred_element_type=jnp.float32)

    if mask_ref is not None:
        # masked_fill_(attn_mask, -inf) via a finite additive bias.
        scores = scores + mask_ref[0].astype(jnp.float32) * _MASK_BIAS

    # Softmax over the key axis; reciprocal runs on the EUP alongside exp().
    m = jnp.max(scores, axis=-1, keepdims=True)
    e = jnp.exp(scores - m)
    denom = jnp.sum(e, axis=-1, keepdims=True)
    probs = e * pl.reciprocal(denom, approx=True)

    # TODO(synk): dropout_rate defaults to 0.0 (identity). For rate > 0, draw a
    # keep-mask in-kernel with pltpu.prng_seed + pltpu.prng_random_bits.

    if attn_ref is not None:
        attn_ref[0] = probs.astype(attn_ref.dtype)

    out_ref[0] = jnp.dot(
        probs.astype(v_ref.dtype), v_ref[0],
        preferred_element_type=jnp.float32).astype(out_ref.dtype)


def _pick_block_q(t_q):
    for cand in (512, 256, 128, 64, 32):
        if t_q % cand == 0:
            return cand
    return t_q  # small / odd T_q: take the whole axis as one block.


def general_attention(q, k, v, weights, attn_mask=None, *,
                      return_attn=True, block_q=None):
    """Pallas GeneralAttention forward.

    Args:
      q: (B, T_q, D_q)
      k: (B, T_k, D_k)
      v: (B, T_k, D_v)
      weights: (D_q, D_k) projection (the module's nn.Parameter).
      attn_mask: optional (B, T_q, T_k); True / nonzero entries are masked.
      return_attn: also return the (B, T_q, T_k) attention matrix.

    Returns:
      output (B, T_q, D_v) [, attention (B, T_q, T_k) float32]
    """
    B, T_q, D_q = q.shape
    Bk, T_k, D_k = k.shape
    Bv, T_v, D_v = v.shape
    assert B == Bk == Bv and T_k == T_v
    assert weights.shape == (D_q, D_k)

    tq = block_q if block_q is not None else _pick_block_q(T_q)
    assert T_q % tq == 0, "block_q must divide T_q"
    grid = (B, T_q // tq)

    in_specs = [
        pl.BlockSpec((1, tq, D_q), lambda b, i: (b, i, 0)),
        pl.BlockSpec((1, T_k, D_k), lambda b, i: (b, 0, 0)),
        pl.BlockSpec((1, T_k, D_v), lambda b, i: (b, 0, 0)),
        pl.BlockSpec((D_q, D_k), lambda b, i: (0, 0)),
    ]
    args = [q, k, v, weights]

    has_mask = attn_mask is not None
    if has_mask:
        in_specs.append(pl.BlockSpec((1, tq, T_k), lambda b, i: (b, i, 0)))
        args.append((attn_mask != 0).astype(jnp.int8))

    out_shape = [jax.ShapeDtypeStruct((B, T_q, D_v), q.dtype)]
    out_specs = [pl.BlockSpec((1, tq, D_v), lambda b, i: (b, i, 0))]
    if return_attn:
        out_shape.append(jax.ShapeDtypeStruct((B, T_q, T_k), jnp.float32))
        out_specs.append(pl.BlockSpec((1, tq, T_k), lambda b, i: (b, i, 0)))

    kernel = functools.partial(_general_attn_kernel,
                               has_mask=has_mask, return_attn=return_attn)

    results = pl.pallas_call(
        kernel,
        out_shape=tuple(out_shape),
        grid=grid,
        in_specs=in_specs,
        out_specs=tuple(out_specs),
        scratch_shapes=[pltpu.VMEM((T_k, D_q), jnp.bfloat16)],
        compiler_params=pltpu.CompilerParams(
            dimension_semantics=("parallel", "arbitrary")),
    )(*args)

    if return_attn:
        out, attn = results
        return out, attn
    return results[0] if isinstance(results, (tuple, list)) else results


def _reference(q, k, v, w, attn_mask=None):
    q32, k32, v32, w32 = (x.astype(jnp.float32) for x in (q, k, v, w))
    scores = jnp.einsum("bqd,de,bke->bqk", q32, w32, k32)
    if attn_mask is not None:
        scores = jnp.where(attn_mask, -jnp.inf, scores)
    attn = jax.nn.softmax(scores, axis=-1)
    out = jnp.einsum("bqk,bkd->bqd", attn, v32)
    return out, attn


if __name__ == "__main__":
    key = jax.random.PRNGKey(0)
    kq, kk, kv, kw = jax.random.split(key, 4)

    # Small but lane-dense shapes (last dims multiples of 128 per perf notes).
    B, T_q, T_k, D_q, D_k, D_v = 2, 256, 128, 128, 128, 128

    q = 0.25 * jax.random.normal(kq, (B, T_q, D_q), dtype=jnp.float32)
    k = 0.25 * jax.random.normal(kk, (B, T_k, D_k), dtype=jnp.float32)
    v = jax.random.normal(kv, (B, T_k, D_v), dtype=jnp.float32)

    # xavier_uniform_ equivalent for the module's (D_q, D_k) weight.
    bound = (6.0 / (D_q + D_k)) ** 0.5
    w = jax.random.uniform(kw, (D_q, D_k), jnp.float32, minval=-bound, maxval=bound)

    # Partial mask (no fully-masked rows -> softmax stays well-defined).
    row = jnp.arange(T_q)[None, :, None] % T_k
    col = jnp.arange(T_k)[None, None, :]
    attn_mask = jnp.broadcast_to(col > row, (B, T_q, T_k))

    # --- no-mask path (mask operand never shipped) ---
    out0, attn0 = general_attention(q, k, v, w, None)
    jax.block_until_ready((out0, attn0))
    ref_out0, ref_attn0 = _reference(q, k, v, w, None)
    assert jnp.allclose(out0, ref_out0, atol=2e-2)
    assert jnp.allclose(attn0, ref_attn0, atol=2e-2)

    # --- masked path ---
    out1, attn1 = general_attention(q, k, v, w, attn_mask)
    jax.block_until_ready((out1, attn1))
    ref_out1, ref_attn1 = _reference(q, k, v, w, attn_mask)
    assert jnp.allclose(out1, ref_out1, atol=2e-2)
    assert jnp.allclose(attn1, ref_attn1, atol=2e-2)

    # --- perf path: skip the attention-matrix HBM writeback ---
    out2 = general_attention(q, k, v, w, attn_mask, return_attn=False)
    jax.block_until_ready(out2)
    assert jnp.allclose(out2, ref_out1, atol=2e-2)

    print("KERNEL_OK")
</pallas_src>

<mosaic_0001>
module attributes {stable_mosaic.version = 11 : i64} {
  func.func @_general_attn_kernel(%arg0: i32, %arg1: i32, %arg2: memref<1x256x128xf32, #tpu.memory_space<vmem>>, %arg3: memref<1x128x128xf32, #tpu.memory_space<vmem>>, %arg4: memref<1x128x128xf32, #tpu.memory_space<vmem>>, %arg5: memref<128x128xf32, #tpu.memory_space<vmem>>, %arg6: memref<1x256x128xf32, #tpu.memory_space<vmem>>, %arg7: memref<1x256x128xf32, #tpu.memory_space<vmem>>, %arg8: memref<128x128xbf16, #tpu.memory_space<vmem>>) attributes {dimension_semantics = [#tpu.dimension_semantics<parallel>, #tpu.dimension_semantics<arbitrary>], iteration_bounds = array<i64: 2, 1>, scalar_prefetch = 0 : i64, scratch_operands = 1 : i64, tpu.core_type = #tpu.core_type<tc>, window_params = [{transform_indices = @transform_0, window_bounds = array<i64: 1, 256, 128>}, {transform_indices = @transform_1, window_bounds = array<i64: 1, 128, 128>}, {transform_indices = @transform_2, window_bounds = array<i64: 1, 128, 128>}, {pipeline_mode = #tpu.pipeline_mode<synchronous>, transform_indices = @transform_3, window_bounds = array<i64: 128, 128>}, {transform_indices = @transform_4, window_bounds = array<i64: 1, 256, 128>}, {transform_indices = @transform_5, window_bounds = array<i64: 1, 256, 128>}]} {
    %c0_i32 = arith.constant 0 : i32
    %0 = arith.cmpi eq, %arg1, %c0_i32 : i32
    %1 = arith.extui %0 : i1 to i32
    %c0_i32_0 = arith.constant 0 : i32
    %2 = arith.cmpi ne, %1, %c0_i32_0 : i32
    scf.if %2 {
      %c0_17 = arith.constant 0 : index
      %c0_18 = arith.constant 0 : index
      %c0_19 = arith.constant 0 : index
      %27 = vector.load %arg3[%c0_17, %c0_18, %c0_19] : memref<1x128x128xf32, #tpu.memory_space<vmem>>, vector<1x128x128xf32>
      %28 = vector.shape_cast %27 : vector<1x128x128xf32> to vector<128x128xf32>
      %29 = arith.truncf %28 : vector<128x128xf32> to vector<128x128xbf16>
      %c0_20 = arith.constant 0 : index
      %c0_21 = arith.constant 0 : index
      %30 = vector.load %arg5[%c0_20, %c0_21] : memref<128x128xf32, #tpu.memory_space<vmem>>, vector<128x128xf32>
      %31 = arith.truncf %30 : vector<128x128xf32> to vector<128x128xbf16>
      %cst_22 = arith.constant dense<0.000000e+00> : vector<128x128xf32>
      %32 = tpu.matmul %29, %31, %cst_22 {dimension_numbers = #tpu.dot_dimension_numbers<[1], [1], [0], [0], [0, 0, 1, 0], [], []>} : vector<128x128xbf16>, vector<128x128xbf16>, vector<128x128xf32> -> vector<128x128xf32>
      %33 = arith.truncf %32 : vector<128x128xf32> to vector<128x128xbf16>
      %c0_23 = arith.constant 0 : index
      %c0_24 = arith.constant 0 : index
      %34 = vector.load %arg8[%c0_23, %c0_24] : memref<128x128xbf16, #tpu.memory_space<vmem>>, vector<128x128xbf16>
      tpu.vector_store %arg8[%c0_23, %c0_24], %33 {strides = array<i32>} : memref<128x128xbf16, #tpu.memory_space<vmem>>, vector<128x128xbf16>,
    } else {
    }
    %c0 = arith.constant 0 : index
    %c0_1 = arith.constant 0 : index
    %c0_2 = arith.constant 0 : index
    %3 = vector.load %arg2[%c0, %c0_1, %c0_2] : memref<1x256x128xf32, #tpu.memory_space<vmem>>, vector<1x256x128xf32>
    %4 = vector.shape_cast %3 : vector<1x256x128xf32> to vector<256x128xf32>
    %5 = arith.truncf %4 : vector<256x128xf32> to vector<256x128xbf16>
    %c0_3 = arith.constant 0 : index
    %c0_4 = arith.constant 0 : index
    %6 = vector.load %arg8[%c0_3, %c0_4] : memref<128x128xbf16, #tpu.memory_space<vmem>>, vector<128x128xbf16>
    %cst = arith.constant dense<0.000000e+00> : vector<256x128xf32>
    %7 = tpu.matmul %5, %6, %cst {dimension_numbers = #tpu.dot_dimension_numbers<[1], [1], [0], [0], [0, 0, 1, 0], [], []>} : vector<256x128xbf16>, vector<128x128xbf16>, vector<256x128xf32> -> vector<256x128xf32>
    %cst_5 = arith.constant dense<0xFF800000> : vector<256xf32>
    %8 = vector.multi_reduction <maximumf>, %7, %cst_5 [1] : vector<256x128xf32> to vector<256xf32>
    %9 = vector.shape_cast %8 : vector<256xf32> to vector<256x1xf32>
    %10 = vector.broadcast %9 : vector<256x1xf32> to vector<256x128xf32>
    %11 = arith.subf %7, %10 : vector<256x128xf32>
    %12 = math.exp %11 : vector<256x128xf32>
    %cst_6 = arith.constant dense<0.000000e+00> : vector<256xf32>
    %13 = vector.multi_reduction <add>, %12, %cst_6 [1] : vector<256x128xf32> to vector<256xf32>
    %14 = vector.shape_cast %13 : vector<256xf32> to vector<256x1xf32>
    %15 = tpu.reciprocal %14 {approx = true} : vector<256x1xf32> -> vector<256x1xf32>
    %16 = vector.broadcast %15 : vector<256x1xf32> to vector<256x128xf32>
    %17 = arith.mulf %12, %16 : vector<256x128xf32>
    %c0_7 = arith.constant 0 : index
    %c0_8 = arith.constant 0 : index
    %c0_9 = arith.constant 0 : index
    %18 = vector.load %arg7[%c0_7, %c0_8, %c0_9] : memref<1x256x128xf32, #tpu.memory_space<vmem>>, vector<1x256x128xf32>
    %19 = vector.shape_cast %18 : vector<1x256x128xf32> to vector<256x128xf32>
    %20 = vector.shape_cast %17 : vector<256x128xf32> to vector<1x256x128xf32>
    tpu.vector_store %arg7[%c0_7, %c0_8, %c0_9], %20 {strides = array<i32>} : memref<1x256x128xf32, #tpu.memory_space<vmem>>, vector<1x256x128xf32>,
    %c0_10 = arith.constant 0 : index
    %c0_11 = arith.constant 0 : index
    %c0_12 = arith.constant 0 : index
    %21 = vector.load %arg4[%c0_10, %c0_11, %c0_12] : memref<1x128x128xf32, #tpu.memory_space<vmem>>, vector<1x128x128xf32>
    %22 = vector.shape_cast %21 : vector<1x128x128xf32> to vector<128x128xf32>
    %cst_13 = arith.constant dense<0.000000e+00> : vector<256x128xf32>
    %23 = tpu.matmul %17, %22, %cst_13 {dimension_numbers = #tpu.dot_dimension_numbers<[1], [0], [0], [1], [0, 0, 1, 1], [], []>} : vector<256x128xf32>, vector<128x128xf32>, vector<256x128xf32> -> vector<256x128xf32>
    %c0_14 = arith.constant 0 : index
    %c0_15 = arith.constant 0 : index
    %c0_16 = arith.constant 0 : index
    %24 = vector.load %arg6[%c0_14, %c0_15, %c0_16] : memref<1x256x128xf32, #tpu.memory_space<vmem>>, vector<1x256x128xf32>
    %25 = vector.shape_cast %24 : vector<1x256x128xf32> to vector<256x128xf32>
    %26 = vector.shape_cast %23 : vector<256x128xf32> to vector<1x256x128xf32>
    tpu.vector_store %arg6[%c0_14, %c0_15, %c0_16], %26 {strides = array<i32>} : memref<1x256x128xf32, #tpu.memory_space<vmem>>, vector<1x256x128xf32>,
    return
  }
  func.func @transform_0(%arg0: i32, %arg1: i32) -> (i32, i32, i32) {
    %c0_i32 = arith.constant 0 : i32
    %c0_i32_0 = arith.constant 0 : i32
    return %arg0, %arg1, %c0_i32 : i32, i32, i32
  }
  func.func @transform_1(%arg0: i32, %arg1: i32) -> (i32, i32, i32) {
    %c0_i32 = arith.constant 0 : i32
    %c0_i32_0 = arith.constant 0 : i32
    %c0_i32_1 = arith.constant 0 : i32
    return %arg0, %c0_i32, %c0_i32_0 : i32, i32, i32
  }
  func.func @transform_2(%arg0: i32, %arg1: i32) -> (i32, i32, i32) {
    %c0_i32 = arith.constant 0 : i32
    %c0_i32_0 = arith.constant 0 : i32
    %c0_i32_1 = arith.constant 0 : i32
    return %arg0, %c0_i32, %c0_i32_0 : i32, i32, i32
  }
  func.func @transform_3(%arg0: i32, %arg1: i32) -> (i32, i32) {
    %c0_i32 = arith.constant 0 : i32
    %c0_i32_0 = arith.constant 0 : i32
    %c0_i32_1 = arith.constant 0 : i32
    return %c0_i32, %c0_i32_0 : i32, i32
  }
  func.func @transform_4(%arg0: i32, %arg1: i32) -> (i32, i32, i32) {
    %c0_i32 = arith.constant 0 : i32
    %c0_i32_0 = arith.constant 0 : i32
    return %arg0, %arg1, %c0_i32 : i32, i32, i32
  }
  func.func @transform_5(%arg0: i32, %arg1: i32) -> (i32, i32, i32) {
    %c0_i32 = arith.constant 0 : i32
    %c0_i32_0 = arith.constant 0 : i32
    return %arg0, %arg1, %c0_i32 : i32, i32, i32
  }
}

</mosaic_0001>

<llo_original>
// kernel: tpu_custom_call.1
$region0: #{tpu_custom_call.1}
  #allocation0 [shape = 'u32[]', space=smem, size = 0x4, offset = 0x4, fixed_abs, tag = 'smem constant byte address 0x4 - core index']
  #allocation1 [shape = 'u32[72,128]{1,0:T(1,128)}', space=vmem, size = 0x9000, scoped, tag = 'internal scratch']
  #allocation2 [shape = 'bf16[128,128]{1,0:T(8,128)(2,1)}', space=vmem, size = 0x8000, scoped, tag = 'scratch operand']
  %s0 = inlined_call_operand.hbm [shape: f32[2,256,128], index: 0, kind: input, shape index: {}]
  %s1 = inlined_call_operand.hbm [shape: f32[2,128,128], index: 1, kind: input, shape index: {}]
  %s2 = inlined_call_operand.hbm [shape: f32[2,128,128], index: 2, kind: input, shape index: {}]
  %s3 = inlined_call_operand.hbm [shape: f32[128,128], index: 3, kind: input, shape index: {}]
  %s4 = inlined_call_operand.hbm [shape: f32[2,256,128], index: 4, kind: output, shape index: {0}]
  %s5 = inlined_call_operand.hbm [shape: f32[2,256,128], index: 5, kind: output, shape index: {1}]
  %6 = xla_tuple %s4, %s5
  %s7 = sld [smem:[#allocation0]]
  $region77: #{tpu_custom_call.1} parent=0
    _
  %s9 = ssub.s32 1, %s7
  %s10 = scalar_select 0, %s9, %s7
  $region1: #{tpu_custom_call.1} parent=0
    #allocation3 [shape = 'u8[262144]{0}', space=vmem, size = 0x40000, scoped, tag = 'input window, operand 0']
    #allocation4 [shape = 's32[2]{0}', space=sflag, size = 0x8, scoped, tag = 'scoped memory for tpu_custom_call.1']
    #allocation5 [shape = 's32[2]{0}', space=sflag, size = 0x8, scoped, tag = 'scoped memory for tpu_custom_call.1']
    #allocation6 [shape = 'u8[131072]{0}', space=vmem, size = 0x20000, scoped, tag = 'input window, operand 1']
    #allocation7 [shape = 's32[2]{0}', space=sflag, size = 0x8, scoped, tag = 'scoped memory for tpu_custom_call.1']
    #allocation8 [shape = 'u8[131072]{0}', space=vmem, size = 0x20000, scoped, tag = 'input window, operand 2']
    #allocation9 [shape = 'u8[65536]{0}', space=vmem, size = 0x10000, scoped, tag = 'input window, operand 3, single buffered']
    #allocation10 [shape = 's32[1]{0}', space=sflag, size = 0x4, scoped, tag = 'scoped memory for tpu_custom_call.1']
    #allocation11 [shape = 'u8[262144]{0}', space=vmem, size = 0x40000, scoped, tag = 'output window, operand 0']
    #allocation12 [shape = 'u8[262144]{0}', space=vmem, size = 0x40000, scoped, tag = 'output window, operand 1']
    #allocation13 [shape = 's32[2]{0}', space=sflag, size = 0x8, scoped, tag = 'scoped memory for tpu_custom_call.1']
    %11 = vsyncpa [#allocation4], 0
    %s12 = scalar_lea.sflag [#allocation4], 1
    %13 = vsyncpa %s12, 0
    %14 = vsyncpa [#allocation7], 0
    %s15 = scalar_lea.sflag [#allocation7], 1
    %16 = vsyncpa %s15, 0
    %17 = vsyncpa [#allocation10], 0
    %18 = vsyncpa [#allocation5], 0
    %s19 = scalar_lea.sflag [#allocation5], 1
    %20 = vsyncpa %s19, 0
    %21 = vsyncpa [#allocation13], 0
    %s22 = scalar_lea.sflag [#allocation13], 1
    %23 = vsyncpa %s22, 0
    loop: start=0, step=1, limit=4
    $region2: #{tpu_custom_call.1} parent=1 // loop_pre_header
      _
    $region3: #{tpu_custom_call.1} parent=1 // loop_header
      %s25 = sphi 0, %s29
      %p26 = scmp.ge.s32.totalorder %s25, 4
      %s32 = sphi 0, %s44
      %s33 = sphi 0, %s40
      %s34 = sphi 0, %s32
      %s35 = sphi 0, %s33
      %s36 = sphi 0, %s34
      %s37 = sphi 0, %s35
      %s49 = sphi 0, %s51
      %s52 = sphi 0, %s49
      %s53 = sphi 0, %s52
      %s69 = sphi 0, %s53
      %s75 = sphi 0, %s77
      %s78 = sphi 0, %s75
      %s79 = sphi 0, %s78
      %s95 = sphi 0, %s79
      %s101 = sphi 0, %s103
      %s104 = sphi 0, %s101
      %s105 = sphi 0, %s104
      %s121 = sphi 0, %s105
      %s125 = sphi 0, %s125
      %s127 = sphi 0, %s125
      %s128 = sphi 0, %s127
      %s142 = sphi 0, %s128
      %s150 = sphi 0, %s152
      %s153 = sphi 0, %s150
      %s154 = sphi 0, %s153
      %s170 = sphi 0, %s154
      %s178 = sphi 0, %s180
      %s181 = sphi 0, %s178
      %s182 = sphi 0, %s181
      %s198 = sphi 0, %s182
    $region4: #{tpu_custom_call.1} parent=1 // loop_header_branch
      %28 = sbr.rel (%p26) target = $region8
    $region5: #{tpu_custom_call.1} parent=1 // loop_body
      %s30 = ssub.s32 %s25, 1
      %s31 = ssub.s32 %s25, 2
      %s38 = sadd.s32 1, %s33
      %p39 = scmp.ge.s32.totalorder %s38, 1
      %s40 = scalar_select %p39, 0, %s38
      %s41 = sadd.s32 1, %s32
      %s42 = scalar_select %p39, %s41, %s32
      %p43 = scmp.ge.s32.totalorder %s42, 2
      %s44 = scalar_select %p43, 0, %s42
      %s45 = ssub.s32 %s32, %s44
      %s46 = ssub.s32 %s33, %s40
      %s47 = sor.u32 %s45, %s46
      %p48 = scmp.eq.s32.totalorder %s47, 0
      %s50 = sadd.s32 %s49, 1
      %s51 = scalar_select %p48, %s49, %s50
      %p54 = pneg %p48
      %p55 = scmp.eq.s32.totalorder %s25, 1
      %p56 = por %p54, %p55
      %p57 = scmp.ne.s32.totalorder %s49, %s52
      %p58 = scmp.eq.s32.totalorder %s25, 0
      %p59 = por %p57, %p58
      %p60 = scmp.ne.s32.totalorder %s49, %s52
      %p61 = scmp.eq.s32.totalorder %s30, 1
      %p62 = por %p60, %p61
      %p63 = scmp.ne.s32.totalorder %s52, %s53
      %p64 = scmp.eq.s32.totalorder %s30, 0
      %p65 = por %p63, %p64
      %p66 = scmp.ne.s32.totalorder %s52, %s53
      %p67 = scmp.eq.s32.totalorder %s31, 1
      %p68 = por %p66, %p67
      %p70 = scmp.ne.s32.totalorder %s53, %s69
      %p71 = scmp.eq.s32.totalorder %s31, 0
      %p72 = por %p70, %p71
      %s73 = ssub.s32 %s32, %s44
      %p74 = scmp.eq.s32.totalorder %s73, 0
      %s76 = sadd.s32 %s75, 1
      %s77 = scalar_select %p74, %s75, %s76
      %p80 = pneg %p74
      %p81 = scmp.eq.s32.totalorder %s25, 1
      %p82 = por %p80, %p81
      %p83 = scmp.ne.s32.totalorder %s75, %s78
      %p84 = scmp.eq.s32.totalorder %s25, 0
      %p85 = por %p83, %p84
      %p86 = scmp.ne.s32.totalorder %s75, %s78
      %p87 = scmp.eq.s32.totalorder %s30, 1
      %p88 = por %p86, %p87
      %p89 = scmp.ne.s32.totalorder %s78, %s79
      %p90 = scmp.eq.s32.totalorder %s30, 0
      %p91 = por %p89, %p90
      %p92 = scmp.ne.s32.totalorder %s78, %s79
      %p93 = scmp.eq.s32.totalorder %s31, 1
      %p94 = por %p92, %p93
      %p96 = scmp.ne.s32.totalorder %s79, %s95
      %p97 = scmp.eq.s32.totalorder %s31, 0
      %p98 = por %p96, %p97
      %s99 = ssub.s32 %s32, %s44
      %p100 = scmp.eq.s32.totalorder %s99, 0
      %s102 = sadd.s32 %s101, 1
      %s103 = scalar_select %p100, %s101, %s102
      %p106 = pneg %p100
      %p107 = scmp.eq.s32.totalorder %s25, 1
      %p108 = por %p106, %p107
      %p109 = scmp.ne.s32.totalorder %s101, %s104
      %p110 = scmp.eq.s32.totalorder %s25, 0
      %p111 = por %p109, %p110
      %p112 = scmp.ne.s32.totalorder %s101, %s104
      %p113 = scmp.eq.s32.totalorder %s30, 1
      %p114 = por %p112, %p113
      %p115 = scmp.ne.s32.totalorder %s104, %s105
      %p116 = scmp.eq.s32.totalorder %s30, 0
      %p117 = por %p115, %p116
      %p118 = scmp.ne.s32.totalorder %s104, %s105
      %p119 = scmp.eq.s32.totalorder %s31, 1
      %p120 = por %p118, %p119
      %p122 = scmp.ne.s32.totalorder %s105, %s121
      %p123 = scmp.eq.s32.totalorder %s31, 0
      %p124 = por %p122, %p123
      %s126 = sadd.s32 %s125, 1
      %p129 = scmp.eq.s32.totalorder %s25, 1
      %p130 = scmp.ne.s32.totalorder %s125, %s127
      %p131 = scmp.eq.s32.totalorder %s25, 0
      %p132 = por %p130, %p131
      %p133 = scmp.ne.s32.totalorder %s125, %s127
      %p134 = scmp.eq.s32.totalorder %s30, 1
      %p135 = por %p133, %p134
      %p136 = scmp.ne.s32.totalorder %s127, %s128
      %p137 = scmp.eq.s32.totalorder %s30, 0
      %p138 = por %p136, %p137
      %p139 = scmp.ne.s32.totalorder %s127, %s128
      %p140 = scmp.eq.s32.totalorder %s31, 1
      %p141 = por %p139, %p140
      %p143 = scmp.ne.s32.totalorder %s128, %s142
      %p144 = scmp.eq.s32.totalorder %s31, 0
      %p145 = por %p143, %p144
      %s146 = ssub.s32 %s32, %s44
      %s147 = ssub.s32 %s33, %s40
      %s148 = sor.u32 %s146, %s147
      %p149 = scmp.eq.s32.totalorder %s148, 0
      %s151 = sadd.s32 %s150, 1
      %s152 = scalar_select %p149, %s150, %s151
      %p155 = pneg %p149
      %p156 = scmp.eq.s32.totalorder %s25, 1
      %p157 = por %p155, %p156
      %p158 = scmp.ne.s32.totalorder %s150, %s153
      %p159 = scmp.eq.s32.totalorder %s25, 0
      %p160 = por %p158, %p159
      %p161 = scmp.ne.s32.totalorder %s150, %s153
      %p162 = scmp.eq.s32.totalorder %s30, 1
      %p163 = por %p161, %p162
      %p164 = scmp.ne.s32.totalorder %s153, %s154
      %p165 = scmp.eq.s32.totalorder %s30, 0
      %p166 = por %p164, %p165
      %p167 = scmp.ne.s32.totalorder %s153, %s154
      %p168 = scmp.eq.s32.totalorder %s31, 1
      %p169 = por %p167, %p168
      %p171 = scmp.ne.s32.totalorder %s154, %s170
      %p172 = scmp.eq.s32.totalorder %s31, 0
      %p173 = por %p171, %p172
      %s174 = ssub.s32 %s32, %s44
      %s175 = ssub.s32 %s33, %s40
      %s176 = sor.u32 %s174, %s175
      %p177 = scmp.eq.s32.totalorder %s176, 0
      %s179 = sadd.s32 %s178, 1
      %s180 = scalar_select %p177, %s178, %s179
      %p183 = pneg %p177
      %p184 = scmp.eq.s32.totalorder %s25, 1
      %p185 = por %p183, %p184
      %p186 = scmp.ne.s32.totalorder %s178, %s181
      %p187 = scmp.eq.s32.totalorder %s25, 0
      %p188 = por %p186, %p187
      %p189 = scmp.ne.s32.totalorder %s178, %s181
      %p190 = scmp.eq.s32.totalorder %s30, 1
      %p191 = por %p189, %p190
      %p192 = scmp.ne.s32.totalorder %s181, %s182
      %p193 = scmp.eq.s32.totalorder %s30, 0
      %p194 = por %p192, %p193
      %p195 = scmp.ne.s32.totalorder %s181, %s182
      %p196 = scmp.eq.s32.totalorder %s31, 1
      %p197 = por %p195, %p196
      %p199 = scmp.ne.s32.totalorder %s182, %s198
      %p200 = scmp.eq.s32.totalorder %s31, 0
      %p201 = por %p199, %p200
      %p202 = scmp.le.s32.totalorder 1, %s25
      %p203 = scmp.lt.s32.totalorder %s25, 3
      %p204 = pnand %p202, %p203
      %p205 = pneg %p204
      // Predicated region
      $region9: #{tpu_custom_call.1} parent=5 // pred_check
        _
      $region10: #{tpu_custom_call.1} parent=5 // pred_check_branch
        %207 = sbr.rel (%p204) target = $region12
      $region11: #{tpu_custom_call.1} parent=5 // pred_region
        %s208 = ssub.s32 %s25, 1
        // Predicated region
        $region13: #{tpu_custom_call.1} parent=11 // pred_check
          %p209 = pneg %p138
        $region14: #{tpu_custom_call.1} parent=11 // pred_check_branch
          %211 = sbr.rel (%p209) target = $region16
        $region15: #{tpu_custom_call.1} parent=11 // pred_region
          %213 = vsyncadd [#allocation10], 0
          %s214 = sshll.u32 %s3, 4
          %s215 = int_to_ptr.hbm [resolvable:$true] %s214
          %s216 = sshll.u32 [#allocation9], 4
          %s217 = int_to_ptr.vmem [resolvable:$true] %s216
          %222 = dma.hbm_to_vmem [thread:$0]  %s215, 2048, %s217, [#allocation10], 128, 128, 8
        $region16: #{tpu_custom_call.1} parent=11 // pred_fallthru
          _
      $region12: #{tpu_custom_call.1} parent=5 // pred_fallthru
        _
      %p223 = scmp.lt.s32.totalorder %s25, 2
      // Predicated region
      $region17: #{tpu_custom_call.1} parent=5 // pred_check
        %p224 = pneg %p223
      $region18: #{tpu_custom_call.1} parent=5 // pred_check_branch
        %226 = sbr.rel (%p224) target = $region20
      $region19: #{tpu_custom_call.1} parent=5 // pred_region
        // Predicated region
        $region21: #{tpu_custom_call.1} parent=19 // pred_check
          %p227 = pneg %p59
        $region22: #{tpu_custom_call.1} parent=19 // pred_check_branch
          %229 = sbr.rel (%p227) target = $region24
        $region23: #{tpu_custom_call.1} parent=19 // pred_region
          %s230 = sand.u32 %s49, 1
          %s231 = scalar_lea.sflag [#allocation4], %s230
          %s232 = sand.u32 %s49, 1
          %s233 = smul.addr %s232, 256
          %s234 = scalar_lea.vmem [#allocation3], %s233
          %s235 = smul.u32 32, %s33
          %237 = vsyncadd %s231, 0
          %s238 = smul.addr %s32, 32
          %s239 = sadd.s32 %s235, %s238
          %s240 = smul.addr %s239, 8
          %s241 = scalar_lea.hbm %s0, %s240
          %s242 = sshll.u32 %s241, 4
          %s243 = int_to_ptr.hbm [resolvable:$true] %s242
          %s244 = sshll.u32 %s234, 4
          %s245 = int_to_ptr.vmem [resolvable:$true] %s244
          %250 = dma.hbm_to_vmem [thread:$0]  %s243, 4096, %s245, %s231, 128, 128, 8
        $region24: #{tpu_custom_call.1} parent=19 // pred_fallthru
          _
        // Predicated region
        $region25: #{tpu_custom_call.1} parent=19 // pred_check
          %p251 = pneg %p85
        $region26: #{tpu_custom_call.1} parent=19 // pred_check_branch
          %253 = sbr.rel (%p251) target = $region28
        $region27: #{tpu_custom_call.1} parent=19 // pred_region
          %s254 = sand.u32 %s25, 1
          %s255 = scalar_lea.sflag [#allocation7], %s254
          %s256 = sand.u32 %s75, 1
          %s257 = smul.addr %s256, 128
          %s258 = scalar_lea.vmem [#allocation6], %s257
          %260 = vsyncadd %s255, 0
          %s261 = smul.addr %s32, 16
          %s262 = smul.addr %s261, 8
          %s263 = scalar_lea.hbm %s1, %s262
          %s264 = sshll.u32 %s263, 4
          %s265 = int_to_ptr.hbm [resolvable:$true] %s264
          %s266 = sshll.u32 %s258, 4
          %s267 = int_to_ptr.vmem [resolvable:$true] %s266
          %272 = dma.hbm_to_vmem [thread:$0]  %s265, 2048, %s267, %s255, 128, 128, 8
        $region28: #{tpu_custom_call.1} parent=19 // pred_fallthru
          _
        // Predicated region
        $region29: #{tpu_custom_call.1} parent=19 // pred_check
          %p273 = pneg %p111
        $region30: #{tpu_custom_call.1} parent=19 // pred_check_branch
          %275 = sbr.rel (%p273) target = $region32
        $region31: #{tpu_custom_call.1} parent=19 // pred_region
          %s276 = sand.u32 %s25, 1
          %s277 = scalar_lea.sflag [#allocation7], %s276
          %s278 = sand.u32 %s101, 1
          %s279 = smul.addr %s278, 128
          %s280 = scalar_lea.vmem [#allocation8], %s279
          %282 = vsyncadd %s277, 0
          %s283 = smul.addr %s32, 16
          %s284 = smul.addr %s283, 8
          %s285 = scalar_lea.hbm %s2, %s284
          %s286 = sshll.u32 %s285, 4
          %s287 = int_to_ptr.hbm [resolvable:$true] %s286
          %s288 = sshll.u32 %s280, 4
          %s289 = int_to_ptr.vmem [resolvable:$true] %s288
          %294 = dma.hbm_to_vmem [thread:$0]  %s287, 2048, %s289, %s277, 128, 128, 8
        $region32: #{tpu_custom_call.1} parent=19 // pred_fallthru
          _
      $region20: #{tpu_custom_call.1} parent=5 // pred_fallthru
        _
      %p295 = scmp.le.s32.totalorder 1, %s25
      %p296 = scmp.lt.s32.totalorder %s25, 3
      %p297 = pnand %p295, %p296
      %p298 = pneg %p297
      // Predicated region
      $region33: #{tpu_custom_call.1} parent=5 // pred_check
        _
      $region34: #{tpu_custom_call.1} parent=5 // pred_check_branch
        %300 = sbr.rel (%p297) target = $region36
      $region35: #{tpu_custom_call.1} parent=5 // pred_region
        %s301 = ssub.s32 %s25, 1
        %s302 = sand.u32 %s52, 1
        %s303 = scalar_lea.sflag [#allocation4], %s302
        %s304 = sand.u32 %s52, 1
        %s305 = smul.addr %s304, 256
        %s306 = scalar_lea.vmem [#allocation3], %s305
        // Predicated region
        $region37: #{tpu_custom_call.1} parent=35 // pred_check
          %p307 = pneg %p65
        $region38: #{tpu_custom_call.1} parent=35 // pred_check_branch
          %309 = sbr.rel (%p307) target = $region40
        $region39: #{tpu_custom_call.1} parent=35 // pred_region
          %311 = dma.done %s303, 4096
        $region40: #{tpu_custom_call.1} parent=35 // pred_fallthru
          _
        %s312 = sand.u32 %s30, 1
        %s313 = scalar_lea.sflag [#allocation7], %s312
        %s314 = sand.u32 %s78, 1
        %s315 = smul.addr %s314, 128
        %s316 = scalar_lea.vmem [#allocation6], %s315
        // Predicated region
        $region41: #{tpu_custom_call.1} parent=35 // pred_check
          %p317 = pneg %p91
        $region42: #{tpu_custom_call.1} parent=35 // pred_check_branch
          %319 = sbr.rel (%p317) target = $region44
        $region43: #{tpu_custom_call.1} parent=35 // pred_region
          %321 = dma.done %s313, 2048
        $region44: #{tpu_custom_call.1} parent=35 // pred_fallthru
          _
        %s322 = sand.u32 %s30, 1
        %s323 = scalar_lea.sflag [#allocation7], %s322
        %s324 = sand.u32 %s104, 1
        %s325 = smul.addr %s324, 128
        %s326 = scalar_lea.vmem [#allocation8], %s325
        // Predicated region
        $region45: #{tpu_custom_call.1} parent=35 // pred_check
          %p327 = pneg %p117
        $region46: #{tpu_custom_call.1} parent=35 // pred_check_branch
          %329 = sbr.rel (%p327) target = $region48
        $region47: #{tpu_custom_call.1} parent=35 // pred_region
          %331 = dma.done %s323, 2048
        $region48: #{tpu_custom_call.1} parent=35 // pred_fallthru
          _
        // Predicated region
        $region49: #{tpu_custom_call.1} parent=35 // pred_check
          %p332 = pneg %p138
        $region50: #{tpu_custom_call.1} parent=35 // pred_check_branch
          %334 = sbr.rel (%p332) target = $region52
        $region51: #{tpu_custom_call.1} parent=35 // pred_region
          %336 = dma.done [#allocation10], 2048
        $region52: #{tpu_custom_call.1} parent=35 // pred_fallthru
          _
        %s337 = sand.u32 %s52, 1
        %s338 = scalar_lea.sflag [#allocation4], %s337
        %s339 = sand.u32 %s52, 1
        %s340 = smul.addr %s339, 256
        %s341 = scalar_lea.vmem [#allocation3], %s340
        %p342 = pneg %p65
        %p343 = pneg %p62
        %s344 = sand.u32 %s30, 1
        %s345 = scalar_lea.sflag [#allocation7], %s344
        %s346 = sand.u32 %s78, 1
        %s347 = smul.addr %s346, 128
        %s348 = scalar_lea.vmem [#allocation6], %s347
        %p349 = pneg %p91
        %p350 = pneg %p88
        %s351 = sand.u32 %s30, 1
        %s352 = scalar_lea.sflag [#allocation7], %s351
        %s353 = sand.u32 %s104, 1
        %s354 = smul.addr %s353, 128
        %s355 = scalar_lea.vmem [#allocation8], %s354
        %p356 = pneg %p117
        %p357 = pneg %p114
        %p358 = pneg %p138
        %p359 = pneg %p135
        %p360 = pneg %p166
        %p361 = pneg %p163
        %s362 = sand.u32 %s153, 1
        %s363 = scalar_lea.sflag [#allocation5], %s362
        %s364 = sand.u32 %s153, 1
        %s365 = smul.addr %s364, 256
        %s366 = scalar_lea.vmem [#allocation11], %s365
        %p367 = pneg %p194
        %p368 = pneg %p191
        %s369 = sand.u32 %s181, 1
        %s370 = scalar_lea.sflag [#allocation13], %s369
        %s371 = sand.u32 %s181, 1
        %s372 = smul.addr %s371, 256
        %s373 = scalar_lea.vmem [#allocation12], %s372
        %s374 = smul.u32 32, %s35
        %s375 = smul.u32 32, %s35
        %s376 = smul.u32 32, %s35
        %p377 = scmp.eq.s32.totalorder %s35, 0
        // Predicated region
        $region53: #{tpu_custom_call.1} parent=35 // pred_check
          %p378 = pneg %p377
        $region54: #{tpu_custom_call.1} parent=35 // pred_check_branch
          %380 = sbr.rel (%p378) target = $region56
        $region55: #{tpu_custom_call.1} parent=35 // pred_region
          %v381 = vld [vmem:[%s316] sm:$0xff]
          %v382 = vld [vmem:[%s316 + $0x8] sm:$0xff]
          %v383 = vld [vmem:[%s316 + $0x10] sm:$0xff]
          %v384 = vld [vmem:[%s316 + $0x18] sm:$0xff]
          %v385 = vld [vmem:[%s316 + $0x20] sm:$0xff]
          %v386 = vld [vmem:[%s316 + $0x28] sm:$0xff]
          %v387 = vld [vmem:[%s316 + $0x30] sm:$0xff]
          %v388 = vld [vmem:[%s316 + $0x38] sm:$0xff]
          %v389 = vld [vmem:[%s316 + $0x40] sm:$0xff]
          %v390 = vld [vmem:[%s316 + $0x48] sm:$0xff]
          %v391 = vld [vmem:[%s316 + $0x50] sm:$0xff]
          %v392 = vld [vmem:[%s316 + $0x58] sm:$0xff]
          %v393 = vld [vmem:[%s316 + $0x60] sm:$0xff]
          %v394 = vld [vmem:[%s316 + $0x68] sm:$0xff]
          %v395 = vld [vmem:[%s316 + $0x70] sm:$0xff]
          %v396 = vld [vmem:[%s316 + $0x78] sm:$0xff]
          %v397 = vpack.c.bf16 %v382, %v381
          %v398 = vpack.c.bf16 %v384, %v383
          %v399 = vpack.c.bf16 %v386, %v385
          %v400 = vpack.c.bf16 %v388, %v387
          %v401 = vpack.c.bf16 %v390, %v389
          %v402 = vpack.c.bf16 %v392, %v391
          %v403 = vpack.c.bf16 %v394, %v393
          %v404 = vpack.c.bf16 %v396, %v395
          %v405 = vld [vmem:[#allocation9] sm:$0xff]
          %v406 = vld [vmem:[#allocation9 + $0x8] sm:$0xff]
          %v407 = vld [vmem:[#allocation9 + $0x10] sm:$0xff]
          %v408 = vld [vmem:[#allocation9 + $0x18] sm:$0xff]
          %v409 = vld [vmem:[#allocation9 + $0x20] sm:$0xff]
          %v410 = vld [vmem:[#allocation9 + $0x28] sm:$0xff]
          %v411 = vld [vmem:[#allocation9 + $0x30] sm:$0xff]
          %v412 = vld [vmem:[#allocation9 + $0x38] sm:$0xff]
          %v413 = vld [vmem:[#allocation9 + $0x40] sm:$0xff]
          %v414 = vld [vmem:[#allocation9 + $0x48] sm:$0xff]
          %v415 = vld [vmem:[#allocation9 + $0x50] sm:$0xff]
          %v416 = vld [vmem:[#allocation9 + $0x58] sm:$0xff]
          %v417 = vld [vmem:[#allocation9 + $0x60] sm:$0xff]
          %v418 = vld [vmem:[#allocation9 + $0x68] sm:$0xff]
          %v419 = vld [vmem:[#allocation9 + $0x70] sm:$0xff]
          %v420 = vld [vmem:[#allocation9 + $0x78] sm:$0xff]
          %v421 = vpack.c.bf16 %v406, %v405
          %v422 = vpack.c.bf16 %v408, %v407
          %v423 = vpack.c.bf16 %v410, %v409
          %v424 = vpack.c.bf16 %v412, %v411
          %v425 = vpack.c.bf16 %v414, %v413
          %v426 = vpack.c.bf16 %v416, %v415
          %v427 = vpack.c.bf16 %v418, %v417
          %v428 = vpack.c.bf16 %v420, %v419
          %429 = vmatpush.bf16.xpose.msra.mxu0 %v428
          %430 = vmatpush.bf16.xpose.msra.mxu0 %v427
          %431 = vmatpush.bf16.xpose.msra.mxu0 %v426
          %432 = vmatpush.bf16.xpose.msra.mxu0 %v425
          %433 = vmatpush.bf16.xpose.msra.mxu0 %v424
          %434 = vmatpush.bf16.xpose.msra.mxu0 %v423
          %435 = vmatpush.bf16.xpose.msra.mxu0 %v422
          %436 = vmatpush.bf16.xpose.msra.mxu0 %v421
          %437 = vmatmul.bf16.gmra.mxu0 %v397
          %v438 = vpop.f32.mrf.mxu0
          %v439 = vadd.f32 0.0, %v438
          %v440 = vpop.f32.mrf.mxu0
          %v441 = vadd.f32 0.0, %v440
          %442 = vmatmul.bf16.gmra.mxu0 %v398
          %v443 = vpop.f32.mrf.mxu0
          %v444 = vadd.f32 0.0, %v443
          %v445 = vpop.f32.mrf.mxu0
          %v446 = vadd.f32 0.0, %v445
          %447 = vmatmul.bf16.gmra.mxu0 %v399
          %v448 = vpop.f32.mrf.mxu0
          %v449 = vadd.f32 0.0, %v448
          %v450 = vpop.f32.mrf.mxu0
          %v451 = vadd.f32 0.0, %v450
          %452 = vmatmul.bf16.gmra.mxu0 %v400
          %v453 = vpop.f32.mrf.mxu0
          %v454 = vadd.f32 0.0, %v453
          %v455 = vpop.f32.mrf.mxu0
          %v456 = vadd.f32 0.0, %v455
          %457 = vmatmul.bf16.gmra.mxu0 %v401
          %v458 = vpop.f32.mrf.mxu0
          %v459 = vadd.f32 0.0, %v458
          %v460 = vpop.f32.mrf.mxu0
          %v461 = vadd.f32 0.0, %v460
          %462 = vmatmul.bf16.gmra.mxu0 %v402
          %v463 = vpop.f32.mrf.mxu0
          %v464 = vadd.f32 0.0, %v463
          %v465 = vpop.f32.mrf.mxu0
          %v466 = vadd.f32 0.0, %v465
          %467 = vmatmul.bf16.gmra.mxu0 %v403
          %v468 = vpop.f32.mrf.mxu0
          %v469 = vadd.f32 0.0, %v468
          %v470 = vpop.f32.mrf.mxu0
          %v471 = vadd.f32 0.0, %v470
          %472 = vmatmul.bf16.gmra.mxu0 %v404
          %v473 = vpop.f32.mrf.mxu0
          %v474 = vadd.f32 0.0, %v473
          %v475 = vpop.f32.mrf.mxu0
          %v476 = vadd.f32 0.0, %v475
          %477 = vdwg.mxu0
          %v478 = vpack.c.bf16 %v439, %v439
          %v479 = vpack.c.bf16 %v441, %v441
          %v480 = vpack.c.bf16 %v444, %v444
          %v481 = vpack.c.bf16 %v446, %v446
          %v482 = vpack.c.bf16 %v449, %v449
          %v483 = vpack.c.bf16 %v451, %v451
          %v484 = vpack.c.bf16 %v454, %v454
          %v485 = vpack.c.bf16 %v456, %v456
          %v486 = vpack.c.bf16 %v459, %v459
          %v487 = vpack.c.bf16 %v461, %v461
          %v488 = vpack.c.bf16 %v464, %v464
          %v489 = vpack.c.bf16 %v466, %v466
          %v490 = vpack.c.bf16 %v469, %v469
          %v491 = vpack.c.bf16 %v471, %v471
          %v492 = vpack.c.bf16 %v474, %v474
          %v493 = vpack.c.bf16 %v476, %v476
          %494 = vst [vmem:[#allocation2] sm:$0xf] %v478
          %495 = vst [vmem:[#allocation2 + $0x4] sm:$0xf] %v479
          %496 = vst [vmem:[#allocation2 + $0x8] sm:$0xf] %v480
          %497 = vst [vmem:[#allocation2 + $0xc] sm:$0xf] %v481
          %498 = vst [vmem:[#allocation2 + $0x10] sm:$0xf] %v482
          %499 = vst [vmem:[#allocation2 + $0x14] sm:$0xf] %v483
          %500 = vst [vmem:[#allocation2 + $0x18] sm:$0xf] %v484
          %501 = vst [vmem:[#allocation2 + $0x1c] sm:$0xf] %v485
          %502 = vst [vmem:[#allocation2 + $0x20] sm:$0xf] %v486
          %503 = vst [vmem:[#allocation2 + $0x24] sm:$0xf] %v487
          %504 = vst [vmem:[#allocation2 + $0x28] sm:$0xf] %v488
          %505 = vst [vmem:[#allocation2 + $0x2c] sm:$0xf] %v489
          %506 = vst [vmem:[#allocation2 + $0x30] sm:$0xf] %v490
          %507 = vst [vmem:[#allocation2 + $0x34] sm:$0xf] %v491
          %508 = vst [vmem:[#allocation2 + $0x38] sm:$0xf] %v492
          %509 = vst [vmem:[#allocation2 + $0x3c] sm:$0xf] %v493
        $region56: #{tpu_custom_call.1} parent=35 // pred_fallthru
          _
        %v510 = vld [vmem:[%s306] sm:$0xff]
        %v511 = vld [vmem:[%s306 + $0x8] sm:$0xff]
        %v512 = vld [vmem:[%s306 + $0x10] sm:$0xff]
        %v513 = vld [vmem:[%s306 + $0x18] sm:$0xff]
        %v514 = vld [vmem:[%s306 + $0x20] sm:$0xff]
        %v515 = vld [vmem:[%s306 + $0x28] sm:$0xff]
        %v516 = vld [vmem:[%s306 + $0x30] sm:$0xff]
        %v517 = vld [vmem:[%s306 + $0x38] sm:$0xff]
        %v518 = vld [vmem:[%s306 + $0x40] sm:$0xff]
        %v519 = vld [vmem:[%s306 + $0x48] sm:$0xff]
        %v520 = vld [vmem:[%s306 + $0x50] sm:$0xff]
        %v521 = vld [vmem:[%s306 + $0x58] sm:$0xff]
        %v522 = vld [vmem:[%s306 + $0x60] sm:$0xff]
        %v523 = vld [vmem:[%s306 + $0x68] sm:$0xff]
        %v524 = vld [vmem:[%s306 + $0x70] sm:$0xff]
        %v525 = vld [vmem:[%s306 + $0x78] sm:$0xff]
        %v526 = vld [vmem:[%s306 + $0x80] sm:$0xff]
        %v527 = vld [vmem:[%s306 + $0x88] sm:$0xff]
        %v528 = vld [vmem:[%s306 + $0x90] sm:$0xff]
        %v529 = vld [vmem:[%s306 + $0x98] sm:$0xff]
        %v530 = vld [vmem:[%s306 + $0xa0] sm:$0xff]
        %v531 = vld [vmem:[%s306 + $0xa8] sm:$0xff]
        %v532 = vld [vmem:[%s306 + $0xb0] sm:$0xff]
        %v533 = vld [vmem:[%s306 + $0xb8] sm:$0xff]
        %v534 = vld [vmem:[%s306 + $0xc0] sm:$0xff]
        %v535 = vld [vmem:[%s306 + $0xc8] sm:$0xff]
        %v536 = vld [vmem:[%s306 + $0xd0] sm:$0xff]
        %v537 = vld [vmem:[%s306 + $0xd8] sm:$0xff]
        %v538 = vld [vmem:[%s306 + $0xe0] sm:$0xff]
        %v539 = vld [vmem:[%s306 + $0xe8] sm:$0xff]
        %v540 = vld [vmem:[%s306 + $0xf0] sm:$0xff]
        %v541 = vld [vmem:[%s306 + $0xf8] sm:$0xff]
        %v542 = vpack.c.bf16 %v511, %v510
        %v543 = vpack.c.bf16 %v513, %v512
        %v544 = vpack.c.bf16 %v515, %v514
        %v545 = vpack.c.bf16 %v517, %v516
        %v546 = vpack.c.bf16 %v519, %v518
        %v547 = vpack.c.bf16 %v521, %v520
        %v548 = vpack.c.bf16 %v523, %v522
        %v549 = vpack.c.bf16 %v525, %v524
        %v550 = vpack.c.bf16 %v527, %v526
        %v551 = vpack.c.bf16 %v529, %v528
        %v552 = vpack.c.bf16 %v531, %v530
        %v553 = vpack.c.bf16 %v533, %v532
        %v554 = vpack.c.bf16 %v535, %v534
        %v555 = vpack.c.bf16 %v537, %v536
        %v556 = vpack.c.bf16 %v539, %v538
        %v557 = vpack.c.bf16 %v541, %v540
        %v558 = vld [vmem:[#allocation2] sm:$0xf]
        %v559 = vld [vmem:[#allocation2 + $0x4] sm:$0xf]
        %v560 = vld [vmem:[#allocation2 + $0x8] sm:$0xf]
        %v561 = vld [vmem:[#allocation2 + $0xc] sm:$0xf]
        %v562 = vld [vmem:[#allocation2 + $0x10] sm:$0xf]
        %v563 = vld [vmem:[#allocation2 + $0x14] sm:$0xf]
        %v564 = vld [vmem:[#allocation2 + $0x18] sm:$0xf]
        %v565 = vld [vmem:[#allocation2 + $0x1c] sm:$0xf]
        %v566 = vld [vmem:[#allocation2 + $0x20] sm:$0xf]
        %v567 = vld [vmem:[#allocation2 + $0x24] sm:$0xf]
        %v568 = vld [vmem:[#allocation2 + $0x28] sm:$0xf]
        %v569 = vld [vmem:[#allocation2 + $0x2c] sm:$0xf]
        %v570 = vld [vmem:[#allocation2 + $0x30] sm:$0xf]
        %v571 = vld [vmem:[#allocation2 + $0x34] sm:$0xf]
        %v572 = vld [vmem:[#allocation2 + $0x38] sm:$0xf]
        %v573 = vld [vmem:[#allocation2 + $0x3c] sm:$0xf]
        %v590 = vunpack.c.l.b16 %v558
        %v591 = vunpack.c.l.b16 %v559
        %v592 = vunpack.c.l.b16 %v560
        %v593 = vunpack.c.l.b16 %v561
        %v594 = vunpack.c.l.b16 %v562
        %v595 = vunpack.c.l.b16 %v563
        %v596 = vunpack.c.l.b16 %v564
        %v597 = vunpack.c.l.b16 %v565
        %v598 = vunpack.c.l.b16 %v566
        %v599 = vunpack.c.l.b16 %v567
        %v600 = vunpack.c.l.b16 %v568
        %v601 = vunpack.c.l.b16 %v569
        %v602 = vunpack.c.l.b16 %v570
        %v603 = vunpack.c.l.b16 %v571
        %v604 = vunpack.c.l.b16 %v572
        %v605 = vunpack.c.l.b16 %v573
        %v606 = vpack.c.b16 %v591, %v590
        %v607 = vpack.c.b16 %v593, %v592
        %v608 = vpack.c.b16 %v595, %v594
        %v609 = vpack.c.b16 %v597, %v596
        %v610 = vpack.c.b16 %v599, %v598
        %v611 = vpack.c.b16 %v601, %v600
        %v612 = vpack.c.b16 %v603, %v602
        %v613 = vpack.c.b16 %v605, %v604
        %622 = vmatpush.bf16.xpose.msra.mxu0 %v613
        %623 = vmatpush.bf16.xpose.msra.mxu0 %v612
        %624 = vmatpush.bf16.xpose.msra.mxu0 %v611
        %625 = vmatpush.bf16.xpose.msra.mxu0 %v610
        %626 = vmatpush.bf16.xpose.msra.mxu0 %v609
        %627 = vmatpush.bf16.xpose.msra.mxu0 %v608
        %628 = vmatpush.bf16.xpose.msra.mxu0 %v607
        %629 = vmatpush.bf16.xpose.msra.mxu0 %v606
        %630 = vmatmul.bf16.gmra.mxu0 %v542
        %v631 = vpop.f32.mrf.mxu0
        %v632 = vadd.f32 0.0, %v631
        %v633 = vpop.f32.mrf.mxu0
        %v634 = vadd.f32 0.0, %v633
        %635 = vmatmul.bf16.gmra.mxu0 %v543
        %v636 = vpop.f32.mrf.mxu0
        %v637 = vadd.f32 0.0, %v636
        %v638 = vpop.f32.mrf.mxu0
        %v639 = vadd.f32 0.0, %v638
        %640 = vmatmul.bf16.gmra.mxu0 %v544
        %v641 = vpop.f32.mrf.mxu0
        %v642 = vadd.f32 0.0, %v641
        %v643 = vpop.f32.mrf.mxu0
        %v644 = vadd.f32 0.0, %v643
        %645 = vmatmul.bf16.gmra.mxu0 %v545
        %v646 = vpop.f32.mrf.mxu0
        %v647 = vadd.f32 0.0, %v646
        %v648 = vpop.f32.mrf.mxu0
        %v649 = vadd.f32 0.0, %v648
        %650 = vmatmul.bf16.gmra.mxu0 %v546
        %v651 = vpop.f32.mrf.mxu0
        %v652 = vadd.f32 0.0, %v651
        %v653 = vpop.f32.mrf.mxu0
        %v654 = vadd.f32 0.0, %v653
        %655 = vmatmul.bf16.gmra.mxu0 %v547
        %v656 = vpop.f32.mrf.mxu0
        %v657 = vadd.f32 0.0, %v656
        %v658 = vpop.f32.mrf.mxu0
        %v659 = vadd.f32 0.0, %v658
        %660 = vmatmul.bf16.gmra.mxu0 %v548
        %v661 = vpop.f32.mrf.mxu0
        %v662 = vadd.f32 0.0, %v661
        %v663 = vpop.f32.mrf.mxu0
        %v664 = vadd.f32 0.0, %v663
        %665 = vmatmul.bf16.gmra.mxu0 %v549
        %v666 = vpop.f32.mrf.mxu0
        %v667 = vadd.f32 0.0, %v666
        %v668 = vpop.f32.mrf.mxu0
        %v669 = vadd.f32 0.0, %v668
        %670 = vmatmul.bf16.gmra.mxu0 %v550
        %v671 = vpop.f32.mrf.mxu0
        %v672 = vadd.f32 0.0, %v671
        %v673 = vpop.f32.mrf.mxu0
        %v674 = vadd.f32 0.0, %v673
        %675 = vmatmul.bf16.gmra.mxu0 %v551
        %v676 = vpop.f32.mrf.mxu0
        %v677 = vadd.f32 0.0, %v676
        %v678 = vpop.f32.mrf.mxu0
        %v679 = vadd.f32 0.0, %v678
        %680 = vmatmul.bf16.gmra.mxu0 %v552
        %v681 = vpop.f32.mrf.mxu0
        %v682 = vadd.f32 0.0, %v681
        %v683 = vpop.f32.mrf.mxu0
        %v684 = vadd.f32 0.0, %v683
        %685 = vmatmul.bf16.gmra.mxu0 %v553
        %v686 = vpop.f32.mrf.mxu0
        %v687 = vadd.f32 0.0, %v686
        %v688 = vpop.f32.mrf.mxu0
        %v689 = vadd.f32 0.0, %v688
        %690 = vmatmul.bf16.gmra.mxu0 %v554
        %v691 = vpop.f32.mrf.mxu0
        %v692 = vadd.f32 0.0, %v691
        %v693 = vpop.f32.mrf.mxu0
        %v694 = vadd.f32 0.0, %v693
        %695 = vmatmul.bf16.gmra.mxu0 %v555
        %v696 = vpop.f32.mrf.mxu0
        %v697 = vadd.f32 0.0, %v696
        %v698 = vpop.f32.mrf.mxu0
        %v699 = vadd.f32 0.0, %v698
        %700 = vmatmul.bf16.gmra.mxu0 %v556
        %v701 = vpop.f32.mrf.mxu0
        %v702 = vadd.f32 0.0, %v701
        %v703 = vpop.f32.mrf.mxu0
        %v704 = vadd.f32 0.0, %v703
        %705 = vmatmul.bf16.gmra.mxu0 %v557
        %v706 = vpop.f32.mrf.mxu0
        %v707 = vadd.f32 0.0, %v706
        %v708 = vpop.f32.mrf.mxu0
        %v709 = vadd.f32 0.0, %v708
        %710 = vdwg.mxu0
        %711 = vmax.xlane.f32.xlu0 %v632
        %v712 = vpop.xlane.xlu0 %711
        %713 = vmax.xlane.f32.xlu0 %v634
        %v714 = vpop.xlane.xlu0 %713
        %715 = vmax.xlane.f32.xlu0 %v637
        %v716 = vpop.xlane.xlu0 %715
        %717 = vmax.xlane.f32.xlu0 %v639
        %v718 = vpop.xlane.xlu0 %717
        %719 = vmax.xlane.f32.xlu0 %v642
        %v720 = vpop.xlane.xlu0 %719
        %721 = vmax.xlane.f32.xlu0 %v644
        %v722 = vpop.xlane.xlu0 %721
        %723 = vmax.xlane.f32.xlu0 %v647
        %v724 = vpop.xlane.xlu0 %723
        %725 = vmax.xlane.f32.xlu0 %v649
        %v726 = vpop.xlane.xlu0 %725
        %727 = vmax.xlane.f32.xlu0 %v652
        %v728 = vpop.xlane.xlu0 %727
        %729 = vmax.xlane.f32.xlu0 %v654
        %v730 = vpop.xlane.xlu0 %729
        %731 = vmax.xlane.f32.xlu0 %v657
        %v732 = vpop.xlane.xlu0 %731
        %733 = vmax.xlane.f32.xlu0 %v659
        %v734 = vpop.xlane.xlu0 %733
        %735 = vmax.xlane.f32.xlu0 %v662
        %v736 = vpop.xlane.xlu0 %735
        %737 = vmax.xlane.f32.xlu0 %v664
        %v738 = vpop.xlane.xlu0 %737
        %739 = vmax.xlane.f32.xlu0 %v667
        %v740 = vpop.xlane.xlu0 %739
        %741 = vmax.xlane.f32.xlu0 %v669
        %v742 = vpop.xlane.xlu0 %741
        %743 = vmax.xlane.f32.xlu0 %v672
        %v744 = vpop.xlane.xlu0 %743
        %745 = vmax.xlane.f32.xlu0 %v674
        %v746 = vpop.xlane.xlu0 %745
        %747 = vmax.xlane.f32.xlu0 %v677
        %v748 = vpop.xlane.xlu0 %747
        %749 = vmax.xlane.f32.xlu0 %v679
        %v750 = vpop.xlane.xlu0 %749
        %751 = vmax.xlane.f32.xlu0 %v682
        %v752 = vpop.xlane.xlu0 %751
        %753 = vmax.xlane.f32.xlu0 %v684
        %v754 = vpop.xlane.xlu0 %753
        %755 = vmax.xlane.f32.xlu0 %v687
        %v756 = vpop.xlane.xlu0 %755
        %757 = vmax.xlane.f32.xlu0 %v689
        %v758 = vpop.xlane.xlu0 %757
        %759 = vmax.xlane.f32.xlu0 %v692
        %v760 = vpop.xlane.xlu0 %759
        %761 = vmax.xlane.f32.xlu0 %v694
        %v762 = vpop.xlane.xlu0 %761
        %763 = vmax.xlane.f32.xlu0 %v697
        %v764 = vpop.xlane.xlu0 %763
        %765 = vmax.xlane.f32.xlu0 %v699
        %v766 = vpop.xlane.xlu0 %765
        %767 = vmax.xlane.f32.xlu0 %v702
        %v768 = vpop.xlane.xlu0 %767
        %769 = vmax.xlane.f32.xlu0 %v704
        %v770 = vpop.xlane.xlu0 %769
        %771 = vmax.xlane.f32.xlu0 %v707
        %v772 = vpop.xlane.xlu0 %771
        %773 = vmax.xlane.f32.xlu0 %v709
        %v774 = vpop.xlane.xlu0 %773
        %v775 = vsub.f32 %v632, %v712
        %v776 = vsub.f32 %v634, %v714
        %v777 = vsub.f32 %v637, %v716
        %v778 = vsub.f32 %v639, %v718
        %v779 = vsub.f32 %v642, %v720
        %v780 = vsub.f32 %v644, %v722
        %v781 = vsub.f32 %v647, %v724
        %v782 = vsub.f32 %v649, %v726
        %v783 = vsub.f32 %v652, %v728
        %v784 = vsub.f32 %v654, %v730
        %v785 = vsub.f32 %v657, %v732
        %v786 = vsub.f32 %v659, %v734
        %v787 = vsub.f32 %v662, %v736
        %v788 = vsub.f32 %v664, %v738
        %v789 = vsub.f32 %v667, %v740
        %v790 = vsub.f32 %v669, %v742
        %v791 = vsub.f32 %v672, %v744
        %v792 = vsub.f32 %v674, %v746
        %v793 = vsub.f32 %v677, %v748
        %v794 = vsub.f32 %v679, %v750
        %v795 = vsub.f32 %v682, %v752
        %v796 = vsub.f32 %v684, %v754
        %v797 = vsub.f32 %v687, %v756
        %v798 = vsub.f32 %v689, %v758
        %v799 = vsub.f32 %v692, %v760
        %v800 = vsub.f32 %v694, %v762
        %v801 = vsub.f32 %v697, %v764
        %v802 = vsub.f32 %v699, %v766
        %v803 = vsub.f32 %v702, %v768
        %v804 = vsub.f32 %v704, %v770
        %v805 = vsub.f32 %v707, %v772
        %v806 = vsub.f32 %v709, %v774
        %v807 = vmul.f32 %v775, 1.442695
        %v808 = vpow.pop %v807
        %v809 = vmul.f32 %v776, 1.442695
        %v810 = vpow.pop %v809
        %v811 = vmul.f32 %v777, 1.442695
        %v812 = vpow.pop %v811
        %v813 = vmul.f32 %v778, 1.442695
        %v814 = vpow.pop %v813
        %v815 = vmul.f32 %v779, 1.442695
        %v816 = vpow.pop %v815
        %v817 = vmul.f32 %v780, 1.442695
        %v818 = vpow.pop %v817
        %v819 = vmul.f32 %v781, 1.442695
        %v820 = vpow.pop %v819
        %v821 = vmul.f32 %v782, 1.442695
        %v822 = vpow.pop %v821
        %v823 = vmul.f32 %v783, 1.442695
        %v824 = vpow.pop %v823
        %v825 = vmul.f32 %v784, 1.442695
        %v826 = vpow.pop %v825
        %v827 = vmul.f32 %v785, 1.442695
        %v828 = vpow.pop %v827
        %v829 = vmul.f32 %v786, 1.442695
        %v830 = vpow.pop %v829
        %v831 = vmul.f32 %v787, 1.442695
        %v832 = vpow.pop %v831
        %v833 = vmul.f32 %v788, 1.442695
        %v834 = vpow.pop %v833
        %v835 = vmul.f32 %v789, 1.442695
        %v836 = vpow.pop %v835
        %v837 = vmul.f32 %v790, 1.442695
        %v838 = vpow.pop %v837
        %v839 = vmul.f32 %v791, 1.442695
        %v840 = vpow.pop %v839
        %v841 = vmul.f32 %v792, 1.442695
        %v842 = vpow.pop %v841
        %v843 = vmul.f32 %v793, 1.442695
        %v844 = vpow.pop %v843
        %v845 = vmul.f32 %v794, 1.442695
        %v846 = vpow.pop %v845
        %v847 = vmul.f32 %v795, 1.442695
        %v848 = vpow.pop %v847
        %v849 = vmul.f32 %v796, 1.442695
        %v850 = vpow.pop %v849
        %v851 = vmul.f32 %v797, 1.442695
        %v852 = vpow.pop %v851
        %v853 = vmul.f32 %v798, 1.442695
        %v854 = vpow.pop %v853
        %v855 = vmul.f32 %v799, 1.442695
        %v856 = vpow.pop %v855
        %v857 = vmul.f32 %v800, 1.442695
        %v858 = vpow.pop %v857
        %v859 = vmul.f32 %v801, 1.442695
        %v860 = vpow.pop %v859
        %v861 = vmul.f32 %v802, 1.442695
        %v862 = vpow.pop %v861
        %v863 = vmul.f32 %v803, 1.442695
        %v864 = vpow.pop %v863
        %v865 = vmul.f32 %v804, 1.442695
        %v866 = vpow.pop %v865
        %v867 = vmul.f32 %v805, 1.442695
        %v868 = vpow.pop %v867
        %v869 = vmul.f32 %v806, 1.442695
        %v870 = vpow.pop %v869
        %871 = vadd.xlane.f32.xlu0 %v808
        %v872 = vpop.xlane.xlu0 %871
        %873 = vadd.xlane.f32.xlu0 %v810
        %v874 = vpop.xlane.xlu0 %873
        %875 = vadd.xlane.f32.xlu0 %v812
        %v876 = vpop.xlane.xlu0 %875
        %877 = vadd.xlane.f32.xlu0 %v814
        %v878 = vpop.xlane.xlu0 %877
        %879 = vadd.xlane.f32.xlu0 %v816
        %v880 = vpop.xlane.xlu0 %879
        %881 = vadd.xlane.f32.xlu0 %v818
        %v882 = vpop.xlane.xlu0 %881
        %883 = vadd.xlane.f32.xlu0 %v820
        %v884 = vpop.xlane.xlu0 %883
        %885 = vadd.xlane.f32.xlu0 %v822
        %v886 = vpop.xlane.xlu0 %885
        %887 = vadd.xlane.f32.xlu0 %v824
        %v888 = vpop.xlane.xlu0 %887
        %889 = vadd.xlane.f32.xlu0 %v826
        %v890 = vpop.xlane.xlu0 %889
        %891 = vadd.xlane.f32.xlu0 %v828
        %v892 = vpop.xlane.xlu0 %891
        %893 = vadd.xlane.f32.xlu0 %v830
        %v894 = vpop.xlane.xlu0 %893
        %895 = vadd.xlane.f32.xlu0 %v832
        %v896 = vpop.xlane.xlu0 %895
        %897 = vadd.xlane.f32.xlu0 %v834
        %v898 = vpop.xlane.xlu0 %897
        %899 = vadd.xlane.f32.xlu0 %v836
        %v900 = vpop.xlane.xlu0 %899
        %901 = vadd.xlane.f32.xlu0 %v838
        %v902 = vpop.xlane.xlu0 %901
        %903 = vadd.xlane.f32.xlu0 %v840
        %v904 = vpop.xlane.xlu0 %903
        %905 = vadd.xlane.f32.xlu0 %v842
        %v906 = vpop.xlane.xlu0 %905
        %907 = vadd.xlane.f32.xlu0 %v844
        %v908 = vpop.xlane.xlu0 %907
        %909 = vadd.xlane.f32.xlu0 %v846
        %v910 = vpop.xlane.xlu0 %909
        %911 = vadd.xlane.f32.xlu0 %v848
        %v912 = vpop.xlane.xlu0 %911
        %913 = vadd.xlane.f32.xlu0 %v850
        %v914 = vpop.xlane.xlu0 %913
        %915 = vadd.xlane.f32.xlu0 %v852
        %v916 = vpop.xlane.xlu0 %915
        %917 = vadd.xlane.f32.xlu0 %v854
        %v918 = vpop.xlane.xlu0 %917
        %919 = vadd.xlane.f32.xlu0 %v856
        %v920 = vpop.xlane.xlu0 %919
        %921 = vadd.xlane.f32.xlu0 %v858
        %v922 = vpop.xlane.xlu0 %921
        %923 = vadd.xlane.f32.xlu0 %v860
        %v924 = vpop.xlane.xlu0 %923
        %925 = vadd.xlane.f32.xlu0 %v862
        %v926 = vpop.xlane.xlu0 %925
        %927 = vadd.xlane.f32.xlu0 %v864
        %v928 = vpop.xlane.xlu0 %927
        %929 = vadd.xlane.f32.xlu0 %v866
        %v930 = vpop.xlane.xlu0 %929
        %931 = vadd.xlane.f32.xlu0 %v868
        %v932 = vpop.xlane.xlu0 %931
        %933 = vadd.xlane.f32.xlu0 %v870
        %v934 = vpop.xlane.xlu0 %933
        %v935 = vrcp.pop %v872
        %v936 = vrcp.pop %v874
        %v937 = vrcp.pop %v876
        %v938 = vrcp.pop %v878
        %v939 = vrcp.pop %v880
        %v940 = vrcp.pop %v882
        %v941 = vrcp.pop %v884
        %v942 = vrcp.pop %v886
        %v943 = vrcp.pop %v888
        %v944 = vrcp.pop %v890
        %v945 = vrcp.pop %v892
        %v946 = vrcp.pop %v894
        %v947 = vrcp.pop %v896
        %v948 = vrcp.pop %v898
        %v949 = vrcp.pop %v900
        %v950 = vrcp.pop %v902
        %v951 = vrcp.pop %v904
        %v952 = vrcp.pop %v906
        %v953 = vrcp.pop %v908
        %v954 = vrcp.pop %v910
        %v955 = vrcp.pop %v912
        %v956 = vrcp.pop %v914
        %v957 = vrcp.pop %v916
        %v958 = vrcp.pop %v918
        %v959 = vrcp.pop %v920
        %v960 = vrcp.pop %v922
        %v961 = vrcp.pop %v924
        %v962 = vrcp.pop %v926
        %v963 = vrcp.pop %v928
        %v964 = vrcp.pop %v930
        %v965 = vrcp.pop %v932
        %v966 = vrcp.pop %v934
        %v967 = vmul.f32 %v808, %v935
        %v968 = vmul.f32 %v810, %v936
        %v969 = vmul.f32 %v812, %v937
        %v970 = vmul.f32 %v814, %v938
        %v971 = vmul.f32 %v816, %v939
        %v972 = vmul.f32 %v818, %v940
        %v973 = vmul.f32 %v820, %v941
        %v974 = vmul.f32 %v822, %v942
        %v975 = vmul.f32 %v824, %v943
        %v976 = vmul.f32 %v826, %v944
        %v977 = vmul.f32 %v828, %v945
        %v978 = vmul.f32 %v830, %v946
        %v979 = vmul.f32 %v832, %v947
        %v980 = vmul.f32 %v834, %v948
        %v981 = vmul.f32 %v836, %v949
        %v982 = vmul.f32 %v838, %v950
        %v983 = vmul.f32 %v840, %v951
        %v984 = vmul.f32 %v842, %v952
        %v985 = vmul.f32 %v844, %v953
        %v986 = vmul.f32 %v846, %v954
        %v987 = vmul.f32 %v848, %v955
        %v988 = vmul.f32 %v850, %v956
        %v989 = vmul.f32 %v852, %v957
        %v990 = vmul.f32 %v854, %v958
        %v991 = vmul.f32 %v856, %v959
        %v992 = vmul.f32 %v858, %v960
        %v993 = vmul.f32 %v860, %v961
        %v994 = vmul.f32 %v862, %v962
        %v995 = vmul.f32 %v864, %v963
        %v996 = vmul.f32 %v866, %v964
        %v997 = vmul.f32 %v868, %v965
        %v998 = vmul.f32 %v870, %v966
        %999 = vst [vmem:[%s373] sm:$0xff] %v967
        %1000 = vst [vmem:[%s373 + $0x8] sm:$0xff] %v968
        %1001 = vst [vmem:[%s373 + $0x10] sm:$0xff] %v969
        %1002 = vst [vmem:[%s373 + $0x18] sm:$0xff] %v970
        %1003 = vst [vmem:[%s373 + $0x20] sm:$0xff] %v971
        %1004 = vst [vmem:[%s373 + $0x28] sm:$0xff] %v972
        %1005 = vst [vmem:[%s373 + $0x30] sm:$0xff] %v973
        %1006 = vst [vmem:[%s373 + $0x38] sm:$0xff] %v974
        %1007 = vst [vmem:[%s373 + $0x40] sm:$0xff] %v975
        %1008 = vst [vmem:[%s373 + $0x48] sm:$0xff] %v976
        %1009 = vst [vmem:[%s373 + $0x50] sm:$0xff] %v977
        %1010 = vst [vmem:[%s373 + $0x58] sm:$0xff] %v978
        %1011 = vst [vmem:[%s373 + $0x60] sm:$0xff] %v979
        %1012 = vst [vmem:[%s373 + $0x68] sm:$0xff] %v980
        %1013 = vst [vmem:[%s373 + $0x70] sm:$0xff] %v981
        %1014 = vst [vmem:[%s373 + $0x78] sm:$0xff] %v982
        %1015 = vst [vmem:[%s373 + $0x80] sm:$0xff] %v983
        %1016 = vst [vmem:[%s373 + $0x88] sm:$0xff] %v984
        %1017 = vst [vmem:[%s373 + $0x90] sm:$0xff] %v985
        %1018 = vst [vmem:[%s373 + $0x98] sm:$0xff] %v986
        %1019 = vst [vmem:[%s373 + $0xa0] sm:$0xff] %v987
        %1020 = vst [vmem:[%s373 + $0xa8] sm:$0xff] %v988
        %1021 = vst [vmem:[%s373 + $0xb0] sm:$0xff] %v989
        %1022 = vst [vmem:[%s373 + $0xb8] sm:$0xff] %v990
        %1023 = vst [vmem:[%s373 + $0xc0] sm:$0xff] %v991
        %1024 = vst [vmem:[%s373 + $0xc8] sm:$0xff] %v992
        %1025 = vst [vmem:[%s373 + $0xd0] sm:$0xff] %v993
        %1026 = vst [vmem:[%s373 + $0xd8] sm:$0xff] %v994
        %1027 = vst [vmem:[%s373 + $0xe0] sm:$0xff] %v995
        %1028 = vst [vmem:[%s373 + $0xe8] sm:$0xff] %v996
        %1029 = vst [vmem:[%s373 + $0xf0] sm:$0xff] %v997
        %1030 = vst [vmem:[%s373 + $0xf8] sm:$0xff] %v998
        %v1031 = vld [vmem:[%s326] sm:$0xff]
        %v1032 = vld [vmem:[%s326 + $0x8] sm:$0xff]
        %v1033 = vld [vmem:[%s326 + $0x10] sm:$0xff]
        %v1034 = vld [vmem:[%s326 + $0x18] sm:$0xff]
        %v1035 = vld [vmem:[%s326 + $0x20] sm:$0xff]
        %v1036 = vld [vmem:[%s326 + $0x28] sm:$0xff]
        %v1037 = vld [vmem:[%s326 + $0x30] sm:$0xff]
        %v1038 = vld [vmem:[%s326 + $0x38] sm:$0xff]
        %v1039 = vld [vmem:[%s326 + $0x40] sm:$0xff]
        %v1040 = vld [vmem:[%s326 + $0x48] sm:$0xff]
        %v1041 = vld [vmem:[%s326 + $0x50] sm:$0xff]
        %v1042 = vld [vmem:[%s326 + $0x58] sm:$0xff]
        %v1043 = vld [vmem:[%s326 + $0x60] sm:$0xff]
        %v1044 = vld [vmem:[%s326 + $0x68] sm:$0xff]
        %v1045 = vld [vmem:[%s326 + $0x70] sm:$0xff]
        %v1046 = vld [vmem:[%s326 + $0x78] sm:$0xff]
        %1047 = vmatpush.msra.mxu0 %v1046
        %1048 = vmatpush.msra.mxu0 %v1045
        %1049 = vmatpush.msra.mxu0 %v1044
        %1050 = vmatpush.msra.mxu0 %v1043
        %1051 = vmatpush.msra.mxu0 %v1042
        %1052 = vmatpush.msra.mxu0 %v1041
        %1053 = vmatpush.msra.mxu0 %v1040
        %1054 = vmatpush.msra.mxu0 %v1039
        %1055 = vmatpush.msra.mxu0 %v1038
        %1056 = vmatpush.msra.mxu0 %v1037
        %1057 = vmatpush.msra.mxu0 %v1036
        %1058 = vmatpush.msra.mxu0 %v1035
        %1059 = vmatpush.msra.mxu0 %v1034
        %1060 = vmatpush.msra.mxu0 %v1033
        %1061 = vmatpush.msra.mxu0 %v1032
        %1062 = vmatpush.msra.mxu0 %v1031
        %1063 = vmatmul.f32.gmra.mxu0 %v967
        %v1064 = vpop.f32.mrf.mxu0
        %v1065 = vadd.f32 0.0, %v1064
        %1066 = vmatmul.f32.gmra.mxu0 %v968
        %v1067 = vpop.f32.mrf.mxu0
        %v1068 = vadd.f32 0.0, %v1067
        %1069 = vmatmul.f32.gmra.mxu0 %v969
        %v1070 = vpop.f32.mrf.mxu0
        %v1071 = vadd.f32 0.0, %v1070
        %1072 = vmatmul.f32.gmra.mxu0 %v970
        %v1073 = vpop.f32.mrf.mxu0
        %v1074 = vadd.f32 0.0, %v1073
        %1075 = vmatmul.f32.gmra.mxu0 %v971
        %v1076 = vpop.f32.mrf.mxu0
        %v1077 = vadd.f32 0.0, %v1076
        %1078 = vmatmul.f32.gmra.mxu0 %v972
        %v1079 = vpop.f32.mrf.mxu0
        %v1080 = vadd.f32 0.0, %v1079
        %1081 = vmatmul.f32.gmra.mxu0 %v973
        %v1082 = vpop.f32.mrf.mxu0
        %v1083 = vadd.f32 0.0, %v1082
        %1084 = vmatmul.f32.gmra.mxu0 %v974
        %v1085 = vpop.f32.mrf.mxu0
        %v1086 = vadd.f32 0.0, %v1085
        %1087 = vmatmul.f32.gmra.mxu0 %v975
        %v1088 = vpop.f32.mrf.mxu0
        %v1089 = vadd.f32 0.0, %v1088
        %1090 = vmatmul.f32.gmra.mxu0 %v976
        %v1091 = vpop.f32.mrf.mxu0
        %v1092 = vadd.f32 0.0, %v1091
        %1093 = vmatmul.f32.gmra.mxu0 %v977
        %v1094 = vpop.f32.mrf.mxu0
        %v1095 = vadd.f32 0.0, %v1094
        %1096 = vmatmul.f32.gmra.mxu0 %v978
        %v1097 = vpop.f32.mrf.mxu0
        %v1098 = vadd.f32 0.0, %v1097
        %1099 = vmatmul.f32.gmra.mxu0 %v979
        %v1100 = vpop.f32.mrf.mxu0
        %v1101 = vadd.f32 0.0, %v1100
        %1102 = vmatmul.f32.gmra.mxu0 %v980
        %v1103 = vpop.f32.mrf.mxu0
        %v1104 = vadd.f32 0.0, %v1103
        %1105 = vmatmul.f32.gmra.mxu0 %v981
        %v1106 = vpop.f32.mrf.mxu0
        %v1107 = vadd.f32 0.0, %v1106
        %1108 = vmatmul.f32.gmra.mxu0 %v982
        %v1109 = vpop.f32.mrf.mxu0
        %v1110 = vadd.f32 0.0, %v1109
        %1111 = vmatmul.f32.gmra.mxu0 %v983
        %v1112 = vpop.f32.mrf.mxu0
        %v1113 = vadd.f32 0.0, %v1112
        %1114 = vmatmul.f32.gmra.mxu0 %v984
        %v1115 = vpop.f32.mrf.mxu0
        %v1116 = vadd.f32 0.0, %v1115
        %1117 = vmatmul.f32.gmra.mxu0 %v985
        %v1118 = vpop.f32.mrf.mxu0
        %v1119 = vadd.f32 0.0, %v1118
        %1120 = vmatmul.f32.gmra.mxu0 %v986
        %v1121 = vpop.f32.mrf.mxu0
        %v1122 = vadd.f32 0.0, %v1121
        %1123 = vmatmul.f32.gmra.mxu0 %v987
        %v1124 = vpop.f32.mrf.mxu0
        %v1125 = vadd.f32 0.0, %v1124
        %1126 = vmatmul.f32.gmra.mxu0 %v988
        %v1127 = vpop.f32.mrf.mxu0
        %v1128 = vadd.f32 0.0, %v1127
        %1129 = vmatmul.f32.gmra.mxu0 %v989
        %v1130 = vpop.f32.mrf.mxu0
        %v1131 = vadd.f32 0.0, %v1130
        %1132 = vmatmul.f32.gmra.mxu0 %v990
        %v1133 = vpop.f32.mrf.mxu0
        %v1134 = vadd.f32 0.0, %v1133
        %1135 = vmatmul.f32.gmra.mxu0 %v991
        %v1136 = vpop.f32.mrf.mxu0
        %v1137 = vadd.f32 0.0, %v1136
        %1138 = vmatmul.f32.gmra.mxu0 %v992
        %v1139 = vpop.f32.mrf.mxu0
        %v1140 = vadd.f32 0.0, %v1139
        %1141 = vmatmul.f32.gmra.mxu0 %v993
        %v1142 = vpop.f32.mrf.mxu0
        %v1143 = vadd.f32 0.0, %v1142
        %1144 = vmatmul.f32.gmra.mxu0 %v994
        %v1145 = vpop.f32.mrf.mxu0
        %v1146 = vadd.f32 0.0, %v1145
        %1147 = vmatmul.f32.gmra.mxu0 %v995
        %v1148 = vpop.f32.mrf.mxu0
        %v1149 = vadd.f32 0.0, %v1148
        %1150 = vmatmul.f32.gmra.mxu0 %v996
        %v1151 = vpop.f32.mrf.mxu0
        %v1152 = vadd.f32 0.0, %v1151
        %1153 = vmatmul.f32.gmra.mxu0 %v997
        %v1154 = vpop.f32.mrf.mxu0
        %v1155 = vadd.f32 0.0, %v1154
        %1156 = vmatmul.f32.gmra.mxu0 %v998
        %v1157 = vpop.f32.mrf.mxu0
        %v1158 = vadd.f32 0.0, %v1157
        %1159 = vdwg.mxu0
        %1160 = vst [vmem:[%s366] sm:$0xff] %v1065
        %1161 = vst [vmem:[%s366 + $0x8] sm:$0xff] %v1068
        %1162 = vst [vmem:[%s366 + $0x10] sm:$0xff] %v1071
        %1163 = vst [vmem:[%s366 + $0x18] sm:$0xff] %v1074
        %1164 = vst [vmem:[%s366 + $0x20] sm:$0xff] %v1077
        %1165 = vst [vmem:[%s366 + $0x28] sm:$0xff] %v1080
        %1166 = vst [vmem:[%s366 + $0x30] sm:$0xff] %v1083
        %1167 = vst [vmem:[%s366 + $0x38] sm:$0xff] %v1086
        %1168 = vst [vmem:[%s366 + $0x40] sm:$0xff] %v1089
        %1169 = vst [vmem:[%s366 + $0x48] sm:$0xff] %v1092
        %1170 = vst [vmem:[%s366 + $0x50] sm:$0xff] %v1095
        %1171 = vst [vmem:[%s366 + $0x58] sm:$0xff] %v1098
        %1172 = vst [vmem:[%s366 + $0x60] sm:$0xff] %v1101
        %1173 = vst [vmem:[%s366 + $0x68] sm:$0xff] %v1104
        %1174 = vst [vmem:[%s366 + $0x70] sm:$0xff] %v1107
        %1175 = vst [vmem:[%s366 + $0x78] sm:$0xff] %v1110
        %1176 = vst [vmem:[%s366 + $0x80] sm:$0xff] %v1113
        %1177 = vst [vmem:[%s366 + $0x88] sm:$0xff] %v1116
        %1178 = vst [vmem:[%s366 + $0x90] sm:$0xff] %v1119
        %1179 = vst [vmem:[%s366 + $0x98] sm:$0xff] %v1122
        %1180 = vst [vmem:[%s366 + $0xa0] sm:$0xff] %v1125
        %1181 = vst [vmem:[%s366 + $0xa8] sm:$0xff] %v1128
        %1182 = vst [vmem:[%s366 + $0xb0] sm:$0xff] %v1131
        %1183 = vst [vmem:[%s366 + $0xb8] sm:$0xff] %v1134
        %1184 = vst [vmem:[%s366 + $0xc0] sm:$0xff] %v1137
        %1185 = vst [vmem:[%s366 + $0xc8] sm:$0xff] %v1140
        %1186 = vst [vmem:[%s366 + $0xd0] sm:$0xff] %v1143
        %1187 = vst [vmem:[%s366 + $0xd8] sm:$0xff] %v1146
        %1188 = vst [vmem:[%s366 + $0xe0] sm:$0xff] %v1149
        %1189 = vst [vmem:[%s366 + $0xe8] sm:$0xff] %v1152
        %1190 = vst [vmem:[%s366 + $0xf0] sm:$0xff] %v1155
        %1191 = vst [vmem:[%s366 + $0xf8] sm:$0xff] %v1158
        %s1192 = sand.u32 %s153, 1
        %s1193 = scalar_lea.sflag [#allocation5], %s1192
        %s1194 = sand.u32 %s153, 1
        %s1195 = smul.addr %s1194, 256
        %s1196 = scalar_lea.vmem [#allocation11], %s1195
        %s1197 = sand.u32 %s181, 1
        %s1198 = scalar_lea.sflag [#allocation13], %s1197
        %s1199 = sand.u32 %s181, 1
        %s1200 = smul.addr %s1199, 256
        %s1201 = scalar_lea.vmem [#allocation12], %s1200
        // Predicated region
        $region57: #{tpu_custom_call.1} parent=35 // pred_check
          %p1202 = pneg %p163
        $region58: #{tpu_custom_call.1} parent=35 // pred_check_branch
          %1204 = sbr.rel (%p1202) target = $region60
        $region59: #{tpu_custom_call.1} parent=35 // pred_region
          %s1205 = smul.u32 32, %s35
          %1207 = vsyncadd %s1193, 0
          %s1208 = smul.addr %s34, 32
          %s1209 = sadd.s32 %s1205, %s1208
          %s1210 = smul.addr %s1209, 8
          %s1211 = scalar_lea.hbm %s4, %s1210
          %s1212 = sshll.u32 %s1196, 4
          %s1213 = int_to_ptr.vmem [resolvable:$true] %s1212
          %s1214 = sshll.u32 %s1211, 4
          %s1215 = int_to_ptr.hbm [resolvable:$true] %s1214
          %1220 = dma.vmem_to_hbm [thread:$0]  %s1213, 4096, %s1215, %s1193, 128, 128, 8
        $region60: #{tpu_custom_call.1} parent=35 // pred_fallthru
          _
        // Predicated region
        $region61: #{tpu_custom_call.1} parent=35 // pred_check
          %p1221 = pneg %p191
        $region62: #{tpu_custom_call.1} parent=35 // pred_check_branch
          %1223 = sbr.rel (%p1221) target = $region64
        $region63: #{tpu_custom_call.1} parent=35 // pred_region
          %s1224 = smul.u32 32, %s35
          %1226 = vsyncadd %s1198, 0
          %s1227 = smul.addr %s34, 32
          %s1228 = sadd.s32 %s1224, %s1227
          %s1229 = smul.addr %s1228, 8
          %s1230 = scalar_lea.hbm %s5, %s1229
          %s1231 = sshll.u32 %s1201, 4
          %s1232 = int_to_ptr.vmem [resolvable:$true] %s1231
          %s1233 = sshll.u32 %s1230, 4
          %s1234 = int_to_ptr.hbm [resolvable:$true] %s1233
          %1239 = dma.vmem_to_hbm [thread:$0]  %s1232, 4096, %s1234, %s1198, 128, 128, 8
        $region64: #{tpu_custom_call.1} parent=35 // pred_fallthru
          _
      $region36: #{tpu_custom_call.1} parent=5 // pred_fallthru
        _
      %p1240 = scmp.le.s32.totalorder 2, %s25
      // Predicated region
      $region65: #{tpu_custom_call.1} parent=5 // pred_check
        %p1241 = pneg %p1240
      $region66: #{tpu_custom_call.1} parent=5 // pred_check_branch
        %1243 = sbr.rel (%p1241) target = $region68
      $region67: #{tpu_custom_call.1} parent=5 // pred_region
        %s1244 = ssub.s32 %s25, 2
        // Predicated region
        $region69: #{tpu_custom_call.1} parent=67 // pred_check
          %p1245 = pneg %p169
        $region70: #{tpu_custom_call.1} parent=67 // pred_check_branch
          %1247 = sbr.rel (%p1245) target = $region72
        $region71: #{tpu_custom_call.1} parent=67 // pred_region
          %s1248 = sand.u32 %s154, 1
          %s1249 = scalar_lea.sflag [#allocation5], %s1248
          %s1250 = sand.u32 %s154, 1
          %s1251 = smul.addr %s1250, 256
          %s1252 = scalar_lea.vmem [#allocation11], %s1251
          %1254 = dma.done %s1249, 4096
        $region72: #{tpu_custom_call.1} parent=67 // pred_fallthru
          _
        // Predicated region
        $region73: #{tpu_custom_call.1} parent=67 // pred_check
          %p1255 = pneg %p197
        $region74: #{tpu_custom_call.1} parent=67 // pred_check_branch
          %1257 = sbr.rel (%p1255) target = $region76
        $region75: #{tpu_custom_call.1} parent=67 // pred_region
          %s1258 = sand.u32 %s182, 1
          %s1259 = scalar_lea.sflag [#allocation13], %s1258
          %s1260 = sand.u32 %s182, 1
          %s1261 = smul.addr %s1260, 256
          %s1262 = scalar_lea.vmem [#allocation12], %s1261
          %1264 = dma.done %s1259, 4096
        $region76: #{tpu_custom_call.1} parent=67 // pred_fallthru
          _
      $region68: #{tpu_custom_call.1} parent=5 // pred_fallthru
        _
    $region6: #{tpu_custom_call.1} parent=1 // loop_footer
      %s29 = sadd.s32 1, %s25
    $region7: #{tpu_custom_call.1} parent=1 // loop_footer_branch
      %24 = sbr.rel target = $region3
    $region8: #{tpu_custom_call.1} parent=1 // loop_exit
      _
    %1265 = vsyncpa [#allocation4], 1
    %s1266 = scalar_lea.sflag [#allocation4], 1
    %1267 = vsyncpa %s1266, 1
    %1268 = vsyncpa [#allocation7], 1
    %s1269 = scalar_lea.sflag [#allocation7], 1
    %1270 = vsyncpa %s1269, 1
    %1271 = vsyncpa [#allocation10], 1
    %1272 = vsyncpa [#allocation5], 1
    %s1273 = scalar_lea.sflag [#allocation5], 1
    %1274 = vsyncpa %s1273, 1
    %1275 = vsyncpa [#allocation13], 1
    %s1276 = scalar_lea.sflag [#allocation13], 1
    %1277 = vsyncpa %s1276, 1

</llo_original>
